<compile_context>
chip_gen: v7x
topology: tpu7x:2x2x1
jax: 0.10.0
libtpu: 0.0.40
codegen_flags: <defaults>
</compile_context>

<pallas_src>
import jax
import jax.numpy as jnp
from jax.experimental import pallas as pl
from jax.experimental.pallas import tpu as pltpu


def _encoder_head_kernel(x_ref, w1_ref, b1_ref, w2_ref, b2_ref, o_ref):
    # x_ref:  (TILE_B, D_in) bf16   streamed input tile
    # w1_ref: (D_in, H)      bf16   encoder weight (VMEM-resident)
    # b1_ref: (1, H)         f32    encoder bias
    # w2_ref: (H, P)         f32    head weight
    # b2_ref: (1, P)         f32    head bias
    # o_ref:  (TILE_B, P)    f32    L2-normalized (dim=1) projection tile
    x = x_ref[...]

    # encoder: Linear + ReLU — bf16 operands on the MXU, f32 accumulate.
    h = jnp.dot(x, w1_ref[...], preferred_element_type=jnp.float32) + b1_ref[...]
    h = jnp.maximum(h, 0.0)

    # head: Linear (f32 path — post-matmul activations stay f32 on all gens).
    y = jnp.dot(h, w2_ref[...], preferred_element_type=jnp.float32) + b2_ref[...]

    # F.normalize(y, p=2, dim=1, eps=1e-12)  ==  y * rsqrt(max(||y||^2, eps^2))
    sq = jnp.sum(y * y, axis=1, keepdims=True)
    inv_norm = jax.lax.rsqrt(jnp.maximum(sq, 1e-24))
    o_ref[...] = (y * inv_norm).astype(o_ref.dtype)


def encoder_with_head_forward(x_nchw, w1, b1, w2, b2, *, tile_b=128):
    """Fused forward: normalize(head(encoder(x)), dim=1).

    tile_b: rows per batch tile. 128 matches the MXU row dim (multiples of 256
    are preferred on v6e/v7x for large batches). Double-buffered bf16 x tiles
    of (tile_b, D_in) must stay well under the per-core VMEM budget.
    """
    B = x_nchw.shape[0]
    D_in, H = w1.shape
    P = w2.shape[1]

    # glue: row-major flatten == torch x.view(B, -1) on NCHW
    x2d = x_nchw.reshape(B, D_in).astype(jnp.bfloat16)
    w1_bf = w1.astype(jnp.bfloat16)
    b1_2d = b1.reshape(1, H).astype(jnp.float32)
    w2_f32 = w2.astype(jnp.float32)
    b2_2d = b2.reshape(1, P).astype(jnp.float32)

    n_tiles = pl.cdiv(B, tile_b)
    b_pad = n_tiles * tile_b
    if b_pad != B:
        x2d = jnp.pad(x2d, ((0, b_pad - B), (0, 0)))

    out = pl.pallas_call(
        _encoder_head_kernel,
        out_shape=jax.ShapeDtypeStruct((b_pad, P), jnp.float32),
        grid=(n_tiles,),
        in_specs=[
            # streamed: one batch tile of x per grid step (double-buffered)
            pl.BlockSpec((tile_b, D_in), lambda i: (i, 0)),
            # resident: weights/biases reuse the same block every step
            pl.BlockSpec((D_in, H), lambda i: (0, 0)),
            pl.BlockSpec((1, H), lambda i: (0, 0)),
            pl.BlockSpec((H, P), lambda i: (0, 0)),
            pl.BlockSpec((1, P), lambda i: (0, 0)),
        ],
        out_specs=pl.BlockSpec((tile_b, P), lambda i: (i, 0)),
        compiler_params=pltpu.CompilerParams(
            dimension_semantics=("parallel",),
        ),
    )(x2d, w1_bf, b1_2d, w2_f32, b2_2d)

    return out[:B]


if __name__ == "__main__":
    # small shapes consistent with the forward pass
    B, C, H, W = 2, 4, 16, 16      # NCHW input
    D_in = C * H * W               # 1024 flattened features
    HIDDEN = 32                    # encoder output width
    PROJ = 16                      # projection-head output width

    key = jax.random.PRNGKey(0)
    kx, k1, k2, k3, k4 = jax.random.split(key, 5)

    x = jax.random.normal(kx, (B, C, H, W), dtype=jnp.float32)

    # deterministic parameter init (fan-in scaled, like torch Linear defaults)
    w1 = jax.random.uniform(k1, (D_in, HIDDEN), jnp.float32, -1.0, 1.0) / jnp.sqrt(D_in)
    b1 = jax.random.uniform(k2, (HIDDEN,), jnp.float32, -1.0, 1.0) / jnp.sqrt(D_in)
    w2 = jax.random.uniform(k3, (HIDDEN, PROJ), jnp.float32, -1.0, 1.0) / jnp.sqrt(HIDDEN)
    b2 = jax.random.uniform(k4, (PROJ,), jnp.float32, -1.0, 1.0) / jnp.sqrt(HIDDEN)

    out = encoder_with_head_forward(x, w1, b1, w2, b2)
    out = jax.block_until_ready(out)
    assert out.shape == (B, PROJ)

    hp = jax.lax.Precision.HIGHEST

    # Reference #1: mimic the kernel's bf16 first-matmul operands exactly.
    x_bf = x.reshape(B, -1).astype(jnp.bfloat16).astype(jnp.float32)
    w1_bf = w1.astype(jnp.bfloat16).astype(jnp.float32)
    h_ref = jnp.maximum(jnp.dot(x_bf, w1_bf, precision=hp) + b1, 0.0)
    y_ref = jnp.dot(h_ref, w2, precision=hp) + b2
    ref_bf = y_ref / jnp.maximum(jnp.linalg.norm(y_ref, axis=1, keepdims=True), 1e-12)
    assert jnp.allclose(out, ref_bf, atol=5e-3, rtol=5e-3)

    # Reference #2: pure f32 forward (PyTorch semantics) — loose tolerance
    # because the kernel's first matmul runs with bf16 operands.
    h32 = jnp.maximum(jnp.dot(x.reshape(B, -1), w1, precision=hp) + b1, 0.0)
    y32 = jnp.dot(h32, w2, precision=hp) + b2
    ref32 = y32 / jnp.maximum(jnp.linalg.norm(y32, axis=1, keepdims=True), 1e-12)
    assert jnp.allclose(out, ref32, atol=3e-2, rtol=3e-2)

    # rows of the output must be unit-norm (normalization runs fully in f32)
    assert jnp.allclose(jnp.linalg.norm(out, axis=1), 1.0, atol=1e-5)

    print("KERNEL_OK")
</pallas_src>

<mosaic_0001>
module attributes {stable_mosaic.version = 11 : i64} {
  func.func @_encoder_head_kernel(%arg0: i32, %arg1: memref<128x1024xbf16, #tpu.memory_space<vmem>>, %arg2: memref<1024x32xbf16, #tpu.memory_space<vmem>>, %arg3: memref<1x32xf32, #tpu.memory_space<vmem>>, %arg4: memref<32x16xf32, #tpu.memory_space<vmem>>, %arg5: memref<1x16xf32, #tpu.memory_space<vmem>>, %arg6: memref<128x16xf32, #tpu.memory_space<vmem>>) attributes {dimension_semantics = [#tpu.dimension_semantics<parallel>], iteration_bounds = array<i64: 1>, scalar_prefetch = 0 : i64, scratch_operands = 0 : i64, tpu.core_type = #tpu.core_type<tc>, window_params = [{transform_indices = @transform_0, window_bounds = array<i64: 128, 1024>}, {pipeline_mode = #tpu.pipeline_mode<synchronous>, transform_indices = @transform_1, window_bounds = array<i64: 1024, 32>}, {pipeline_mode = #tpu.pipeline_mode<synchronous>, transform_indices = @transform_2, window_bounds = array<i64: 1, 32>}, {pipeline_mode = #tpu.pipeline_mode<synchronous>, transform_indices = @transform_3, window_bounds = array<i64: 32, 16>}, {pipeline_mode = #tpu.pipeline_mode<synchronous>, transform_indices = @transform_4, window_bounds = array<i64: 1, 16>}, {transform_indices = @transform_5, window_bounds = array<i64: 128, 16>}]} {
    %c0 = arith.constant 0 : index
    %c0_0 = arith.constant 0 : index
    %0 = vector.load %arg1[%c0, %c0_0] : memref<128x1024xbf16, #tpu.memory_space<vmem>>, vector<128x1024xbf16>
    %c0_1 = arith.constant 0 : index
    %c0_2 = arith.constant 0 : index
    %1 = vector.load %arg2[%c0_1, %c0_2] : memref<1024x32xbf16, #tpu.memory_space<vmem>>, vector<1024x32xbf16>
    %cst = arith.constant dense<0.000000e+00> : vector<128x32xf32>
    %2 = tpu.matmul %0, %1, %cst {dimension_numbers = #tpu.dot_dimension_numbers<[1], [0], [0], [1], [0, 0, 1, 1], [], []>} : vector<128x1024xbf16>, vector<1024x32xbf16>, vector<128x32xf32> -> vector<128x32xf32>
    %c0_3 = arith.constant 0 : index
    %c0_4 = arith.constant 0 : index
    %3 = vector.load %arg3[%c0_3, %c0_4] : memref<1x32xf32, #tpu.memory_space<vmem>>, vector<1x32xf32>
    %4 = vector.broadcast %3 : vector<1x32xf32> to vector<128x32xf32>
    %5 = arith.addf %2, %4 : vector<128x32xf32>
    %cst_5 = arith.constant 0.000000e+00 : f32
    %6 = vector.broadcast %cst_5 : f32 to vector<128x32xf32>
    %7 = arith.maximumf %5, %6 : vector<128x32xf32>
    %c0_6 = arith.constant 0 : index
    %c0_7 = arith.constant 0 : index
    %8 = vector.load %arg4[%c0_6, %c0_7] : memref<32x16xf32, #tpu.memory_space<vmem>>, vector<32x16xf32>
    %cst_8 = arith.constant dense<0.000000e+00> : vector<128x16xf32>
    %9 = tpu.matmul %7, %8, %cst_8 {dimension_numbers = #tpu.dot_dimension_numbers<[1], [0], [0], [1], [0, 0, 1, 1], [], []>} : vector<128x32xf32>, vector<32x16xf32>, vector<128x16xf32> -> vector<128x16xf32>
    %c0_9 = arith.constant 0 : index
    %c0_10 = arith.constant 0 : index
    %10 = vector.load %arg5[%c0_9, %c0_10] : memref<1x16xf32, #tpu.memory_space<vmem>>, vector<1x16xf32>
    %11 = vector.broadcast %10 : vector<1x16xf32> to vector<128x16xf32>
    %12 = arith.addf %9, %11 : vector<128x16xf32>
    %13 = arith.mulf %12, %12 : vector<128x16xf32>
    %cst_11 = arith.constant dense<0.000000e+00> : vector<128xf32>
    %14 = vector.multi_reduction <add>, %13, %cst_11 [1] : vector<128x16xf32> to vector<128xf32>
    %15 = vector.shape_cast %14 : vector<128xf32> to vector<128x1xf32>
    %cst_12 = arith.constant 1.000000e-24 : f32
    %16 = vector.broadcast %cst_12 : f32 to vector<128x1xf32>
    %17 = arith.maximumf %15, %16 : vector<128x1xf32>
    %18 = math.rsqrt %17 : vector<128x1xf32>
    %19 = vector.broadcast %18 : vector<128x1xf32> to vector<128x16xf32>
    %20 = arith.mulf %12, %19 : vector<128x16xf32>
    %c0_13 = arith.constant 0 : index
    %c0_14 = arith.constant 0 : index
    %21 = vector.load %arg6[%c0_13, %c0_14] : memref<128x16xf32, #tpu.memory_space<vmem>>, vector<128x16xf32>
    tpu.vector_store %arg6[%c0_13, %c0_14], %20 {strides = array<i32>} : memref<128x16xf32, #tpu.memory_space<vmem>>, vector<128x16xf32>,
    return
  }
  func.func @transform_0(%arg0: i32) -> (i32, i32) {
    %c0_i32 = arith.constant 0 : i32
    %c0_i32_0 = arith.constant 0 : i32
    return %arg0, %c0_i32 : i32, i32
  }
  func.func @transform_1(%arg0: i32) -> (i32, i32) {
    %c0_i32 = arith.constant 0 : i32
    %c0_i32_0 = arith.constant 0 : i32
    %c0_i32_1 = arith.constant 0 : i32
    return %c0_i32, %c0_i32_0 : i32, i32
  }
  func.func @transform_2(%arg0: i32) -> (i32, i32) {
    %c0_i32 = arith.constant 0 : i32
    %c0_i32_0 = arith.constant 0 : i32
    %c0_i32_1 = arith.constant 0 : i32
    return %c0_i32, %c0_i32_0 : i32, i32
  }
  func.func @transform_3(%arg0: i32) -> (i32, i32) {
    %c0_i32 = arith.constant 0 : i32
    %c0_i32_0 = arith.constant 0 : i32
    %c0_i32_1 = arith.constant 0 : i32
    return %c0_i32, %c0_i32_0 : i32, i32
  }
  func.func @transform_4(%arg0: i32) -> (i32, i32) {
    %c0_i32 = arith.constant 0 : i32
    %c0_i32_0 = arith.constant 0 : i32
    %c0_i32_1 = arith.constant 0 : i32
    return %c0_i32, %c0_i32_0 : i32, i32
  }
  func.func @transform_5(%arg0: i32) -> (i32, i32) {
    %c0_i32 = arith.constant 0 : i32
    %c0_i32_0 = arith.constant 0 : i32
    return %arg0, %c0_i32 : i32, i32
  }
}

</mosaic_0001>

<llo_original>
// kernel: tpu_custom_call.1
$region0: #{tpu_custom_call.1}
  #allocation0 [shape = 'u32[]', space=smem, size = 0x4, offset = 0x4, fixed_abs, tag = 'smem constant byte address 0x4 - core index']
  #allocation1 [shape = 'u32[144,128]{1,0:T(1,128)}', space=vmem, size = 0x12000, scoped, tag = 'internal scratch']
  %s0 = inlined_call_operand.vmem [shape: bf16[128,1024], index: 0, kind: input, shape index: {}]
  %s1 = inlined_call_operand.vmem [shape: bf16[1024,32], index: 1, kind: input, shape index: {}]
  %s2 = inlined_call_operand.vmem [shape: f32[1,32], index: 2, kind: input, shape index: {}]
  %s3 = inlined_call_operand.vmem [shape: f32[32,16], index: 3, kind: input, shape index: {}]
  %s4 = inlined_call_operand.vmem [shape: f32[1,16], index: 4, kind: input, shape index: {}]
  %s5 = inlined_call_operand.vmem [shape: f32[128,16], index: 5, kind: output, shape index: {}]
  %s6 = sld [smem:[#allocation0]]
  $region30: #{tpu_custom_call.1} parent=0
    _
  %s8 = ssub.s32 1, %s6
  %s9 = scalar_select 0, %s8, %s6
  // Predicated region
  $region2: #{tpu_custom_call.1} parent=0 // pred_check
    _
  $region3: #{tpu_custom_call.1} parent=0 // pred_check_branch
    %11 = sbr.rel (0) target = $region5
  $region4: #{tpu_custom_call.1} parent=0 // pred_region
    _
  $region5: #{tpu_custom_call.1} parent=0 // pred_fallthru
    _
  // Predicated region
  $region6: #{tpu_custom_call.1} parent=0 // pred_check
    _
  $region7: #{tpu_custom_call.1} parent=0 // pred_check_branch
    %13 = sbr.rel (0) target = $region9
  $region8: #{tpu_custom_call.1} parent=0 // pred_region
    _
  $region9: #{tpu_custom_call.1} parent=0 // pred_fallthru
    _
  // Predicated region
  $region10: #{tpu_custom_call.1} parent=0 // pred_check
    _
  $region11: #{tpu_custom_call.1} parent=0 // pred_check_branch
    %15 = sbr.rel (0) target = $region13
  $region12: #{tpu_custom_call.1} parent=0 // pred_region
    _
  $region13: #{tpu_custom_call.1} parent=0 // pred_fallthru
    _
  // Predicated region
  $region14: #{tpu_custom_call.1} parent=0 // pred_check
    _
  $region15: #{tpu_custom_call.1} parent=0 // pred_check_branch
    %17 = sbr.rel (0) target = $region17
  $region16: #{tpu_custom_call.1} parent=0 // pred_region
    _
  $region17: #{tpu_custom_call.1} parent=0 // pred_fallthru
    _
  // Predicated region
  $region18: #{tpu_custom_call.1} parent=0 // pred_check
    _
  $region19: #{tpu_custom_call.1} parent=0 // pred_check_branch
    %19 = sbr.rel (0) target = $region21
  $region20: #{tpu_custom_call.1} parent=0 // pred_region
    _
  $region21: #{tpu_custom_call.1} parent=0 // pred_fallthru
    _
  %v21 = vld [vmem:[%s0] sm:$0xff]
  %v22 = vld [vmem:[%s0 + $0x8] sm:$0xff]
  %v23 = vld [vmem:[%s0 + $0x10] sm:$0xff]
  %v24 = vld [vmem:[%s0 + $0x18] sm:$0xff]
  %v25 = vld [vmem:[%s0 + $0x20] sm:$0xff]
  %v26 = vld [vmem:[%s0 + $0x28] sm:$0xff]
  %v27 = vld [vmem:[%s0 + $0x30] sm:$0xff]
  %v28 = vld [vmem:[%s0 + $0x38] sm:$0xff]
  %v29 = vld [vmem:[%s0 + $0x40] sm:$0xff]
  %v30 = vld [vmem:[%s0 + $0x48] sm:$0xff]
  %v31 = vld [vmem:[%s0 + $0x50] sm:$0xff]
  %v32 = vld [vmem:[%s0 + $0x58] sm:$0xff]
  %v33 = vld [vmem:[%s0 + $0x60] sm:$0xff]
  %v34 = vld [vmem:[%s0 + $0x68] sm:$0xff]
  %v35 = vld [vmem:[%s0 + $0x70] sm:$0xff]
  %v36 = vld [vmem:[%s0 + $0x78] sm:$0xff]
  %v37 = vld [vmem:[%s0 + $0x80] sm:$0xff]
  %v38 = vld [vmem:[%s0 + $0x88] sm:$0xff]
  %v39 = vld [vmem:[%s0 + $0x90] sm:$0xff]
  %v40 = vld [vmem:[%s0 + $0x98] sm:$0xff]
  %v41 = vld [vmem:[%s0 + $0xa0] sm:$0xff]
  %v42 = vld [vmem:[%s0 + $0xa8] sm:$0xff]
  %v43 = vld [vmem:[%s0 + $0xb0] sm:$0xff]
  %v44 = vld [vmem:[%s0 + $0xb8] sm:$0xff]
  %v45 = vld [vmem:[%s0 + $0xc0] sm:$0xff]
  %v46 = vld [vmem:[%s0 + $0xc8] sm:$0xff]
  %v47 = vld [vmem:[%s0 + $0xd0] sm:$0xff]
  %v48 = vld [vmem:[%s0 + $0xd8] sm:$0xff]
  %v49 = vld [vmem:[%s0 + $0xe0] sm:$0xff]
  %v50 = vld [vmem:[%s0 + $0xe8] sm:$0xff]
  %v51 = vld [vmem:[%s0 + $0xf0] sm:$0xff]
  %v52 = vld [vmem:[%s0 + $0xf8] sm:$0xff]
  %v53 = vld [vmem:[%s0 + $0x100] sm:$0xff]
  %v54 = vld [vmem:[%s0 + $0x108] sm:$0xff]
  %v55 = vld [vmem:[%s0 + $0x110] sm:$0xff]
  %v56 = vld [vmem:[%s0 + $0x118] sm:$0xff]
  %v57 = vld [vmem:[%s0 + $0x120] sm:$0xff]
  %v58 = vld [vmem:[%s0 + $0x128] sm:$0xff]
  %v59 = vld [vmem:[%s0 + $0x130] sm:$0xff]
  %v60 = vld [vmem:[%s0 + $0x138] sm:$0xff]
  %v61 = vld [vmem:[%s0 + $0x140] sm:$0xff]
  %v62 = vld [vmem:[%s0 + $0x148] sm:$0xff]
  %v63 = vld [vmem:[%s0 + $0x150] sm:$0xff]
  %v64 = vld [vmem:[%s0 + $0x158] sm:$0xff]
  %v65 = vld [vmem:[%s0 + $0x160] sm:$0xff]
  %v66 = vld [vmem:[%s0 + $0x168] sm:$0xff]
  %v67 = vld [vmem:[%s0 + $0x170] sm:$0xff]
  %v68 = vld [vmem:[%s0 + $0x178] sm:$0xff]
  %v69 = vld [vmem:[%s0 + $0x180] sm:$0xff]
  %v70 = vld [vmem:[%s0 + $0x188] sm:$0xff]
  %v71 = vld [vmem:[%s0 + $0x190] sm:$0xff]
  %v72 = vld [vmem:[%s0 + $0x198] sm:$0xff]
  %v73 = vld [vmem:[%s0 + $0x1a0] sm:$0xff]
  %v74 = vld [vmem:[%s0 + $0x1a8] sm:$0xff]
  %v75 = vld [vmem:[%s0 + $0x1b0] sm:$0xff]
  %v76 = vld [vmem:[%s0 + $0x1b8] sm:$0xff]
  %v77 = vld [vmem:[%s0 + $0x1c0] sm:$0xff]
  %v78 = vld [vmem:[%s0 + $0x1c8] sm:$0xff]
  %v79 = vld [vmem:[%s0 + $0x1d0] sm:$0xff]
  %v80 = vld [vmem:[%s0 + $0x1d8] sm:$0xff]
  %v81 = vld [vmem:[%s0 + $0x1e0] sm:$0xff]
  %v82 = vld [vmem:[%s0 + $0x1e8] sm:$0xff]
  %v83 = vld [vmem:[%s0 + $0x1f0] sm:$0xff]
  %v84 = vld [vmem:[%s0 + $0x1f8] sm:$0xff]
  %v85 = vld [vmem:[%s1] sm:$0xf]
  %v86 = vld [vmem:[%s1 + $0x4] sm:$0xf]
  %v87 = vld [vmem:[%s1 + $0x8] sm:$0xf]
  %v88 = vld [vmem:[%s1 + $0xc] sm:$0xf]
  %v89 = vld [vmem:[%s1 + $0x10] sm:$0xf]
  %v90 = vld [vmem:[%s1 + $0x14] sm:$0xf]
  %v91 = vld [vmem:[%s1 + $0x18] sm:$0xf]
  %v92 = vld [vmem:[%s1 + $0x1c] sm:$0xf]
  %v93 = vld [vmem:[%s1 + $0x20] sm:$0xf]
  %v94 = vld [vmem:[%s1 + $0x24] sm:$0xf]
  %v95 = vld [vmem:[%s1 + $0x28] sm:$0xf]
  %v96 = vld [vmem:[%s1 + $0x2c] sm:$0xf]
  %v97 = vld [vmem:[%s1 + $0x30] sm:$0xf]
  %v98 = vld [vmem:[%s1 + $0x34] sm:$0xf]
  %v99 = vld [vmem:[%s1 + $0x38] sm:$0xf]
  %v100 = vld [vmem:[%s1 + $0x3c] sm:$0xf]
  %v101 = vld [vmem:[%s1 + $0x40] sm:$0xf]
  %v102 = vld [vmem:[%s1 + $0x44] sm:$0xf]
  %v103 = vld [vmem:[%s1 + $0x48] sm:$0xf]
  %v104 = vld [vmem:[%s1 + $0x4c] sm:$0xf]
  %v105 = vld [vmem:[%s1 + $0x50] sm:$0xf]
  %v106 = vld [vmem:[%s1 + $0x54] sm:$0xf]
  %v107 = vld [vmem:[%s1 + $0x58] sm:$0xf]
  %v108 = vld [vmem:[%s1 + $0x5c] sm:$0xf]
  %v109 = vld [vmem:[%s1 + $0x60] sm:$0xf]
  %v110 = vld [vmem:[%s1 + $0x64] sm:$0xf]
  %v111 = vld [vmem:[%s1 + $0x68] sm:$0xf]
  %v112 = vld [vmem:[%s1 + $0x6c] sm:$0xf]
  %v113 = vld [vmem:[%s1 + $0x70] sm:$0xf]
  %v114 = vld [vmem:[%s1 + $0x74] sm:$0xf]
  %v115 = vld [vmem:[%s1 + $0x78] sm:$0xf]
  %v116 = vld [vmem:[%s1 + $0x7c] sm:$0xf]
  %v117 = vld [vmem:[%s1 + $0x80] sm:$0xf]
  %v118 = vld [vmem:[%s1 + $0x84] sm:$0xf]
  %v119 = vld [vmem:[%s1 + $0x88] sm:$0xf]
  %v120 = vld [vmem:[%s1 + $0x8c] sm:$0xf]
  %v121 = vld [vmem:[%s1 + $0x90] sm:$0xf]
  %v122 = vld [vmem:[%s1 + $0x94] sm:$0xf]
  %v123 = vld [vmem:[%s1 + $0x98] sm:$0xf]
  %v124 = vld [vmem:[%s1 + $0x9c] sm:$0xf]
  %v125 = vld [vmem:[%s1 + $0xa0] sm:$0xf]
  %v126 = vld [vmem:[%s1 + $0xa4] sm:$0xf]
  %v127 = vld [vmem:[%s1 + $0xa8] sm:$0xf]
  %v128 = vld [vmem:[%s1 + $0xac] sm:$0xf]
  %v129 = vld [vmem:[%s1 + $0xb0] sm:$0xf]
  %v130 = vld [vmem:[%s1 + $0xb4] sm:$0xf]
  %v131 = vld [vmem:[%s1 + $0xb8] sm:$0xf]
  %v132 = vld [vmem:[%s1 + $0xbc] sm:$0xf]
  %v133 = vld [vmem:[%s1 + $0xc0] sm:$0xf]
  %v134 = vld [vmem:[%s1 + $0xc4] sm:$0xf]
  %v135 = vld [vmem:[%s1 + $0xc8] sm:$0xf]
  %v136 = vld [vmem:[%s1 + $0xcc] sm:$0xf]
  %v137 = vld [vmem:[%s1 + $0xd0] sm:$0xf]
  %v138 = vld [vmem:[%s1 + $0xd4] sm:$0xf]
  %v139 = vld [vmem:[%s1 + $0xd8] sm:$0xf]
  %v140 = vld [vmem:[%s1 + $0xdc] sm:$0xf]
  %v141 = vld [vmem:[%s1 + $0xe0] sm:$0xf]
  %v142 = vld [vmem:[%s1 + $0xe4] sm:$0xf]
  %v143 = vld [vmem:[%s1 + $0xe8] sm:$0xf]
  %v144 = vld [vmem:[%s1 + $0xec] sm:$0xf]
  %v145 = vld [vmem:[%s1 + $0xf0] sm:$0xf]
  %v146 = vld [vmem:[%s1 + $0xf4] sm:$0xf]
  %v147 = vld [vmem:[%s1 + $0xf8] sm:$0xf]
  %v148 = vld [vmem:[%s1 + $0xfc] sm:$0xf]
  %v149 = vld [vmem:[%s1 + $0x100] sm:$0xf]
  %v150 = vld [vmem:[%s1 + $0x104] sm:$0xf]
  %v151 = vld [vmem:[%s1 + $0x108] sm:$0xf]
  %v152 = vld [vmem:[%s1 + $0x10c] sm:$0xf]
  %v153 = vld [vmem:[%s1 + $0x110] sm:$0xf]
  %v154 = vld [vmem:[%s1 + $0x114] sm:$0xf]
  %v155 = vld [vmem:[%s1 + $0x118] sm:$0xf]
  %v156 = vld [vmem:[%s1 + $0x11c] sm:$0xf]
  %v157 = vld [vmem:[%s1 + $0x120] sm:$0xf]
  %v158 = vld [vmem:[%s1 + $0x124] sm:$0xf]
  %v159 = vld [vmem:[%s1 + $0x128] sm:$0xf]
  %v160 = vld [vmem:[%s1 + $0x12c] sm:$0xf]
  %v161 = vld [vmem:[%s1 + $0x130] sm:$0xf]
  %v162 = vld [vmem:[%s1 + $0x134] sm:$0xf]
  %v163 = vld [vmem:[%s1 + $0x138] sm:$0xf]
  %v164 = vld [vmem:[%s1 + $0x13c] sm:$0xf]
  %v165 = vld [vmem:[%s1 + $0x140] sm:$0xf]
  %v166 = vld [vmem:[%s1 + $0x144] sm:$0xf]
  %v167 = vld [vmem:[%s1 + $0x148] sm:$0xf]
  %v168 = vld [vmem:[%s1 + $0x14c] sm:$0xf]
  %v169 = vld [vmem:[%s1 + $0x150] sm:$0xf]
  %v170 = vld [vmem:[%s1 + $0x154] sm:$0xf]
  %v171 = vld [vmem:[%s1 + $0x158] sm:$0xf]
  %v172 = vld [vmem:[%s1 + $0x15c] sm:$0xf]
  %v173 = vld [vmem:[%s1 + $0x160] sm:$0xf]
  %v174 = vld [vmem:[%s1 + $0x164] sm:$0xf]
  %v175 = vld [vmem:[%s1 + $0x168] sm:$0xf]
  %v176 = vld [vmem:[%s1 + $0x16c] sm:$0xf]
  %v177 = vld [vmem:[%s1 + $0x170] sm:$0xf]
  %v178 = vld [vmem:[%s1 + $0x174] sm:$0xf]
  %v179 = vld [vmem:[%s1 + $0x178] sm:$0xf]
  %v180 = vld [vmem:[%s1 + $0x17c] sm:$0xf]
  %v181 = vld [vmem:[%s1 + $0x180] sm:$0xf]
  %v182 = vld [vmem:[%s1 + $0x184] sm:$0xf]
  %v183 = vld [vmem:[%s1 + $0x188] sm:$0xf]
  %v184 = vld [vmem:[%s1 + $0x18c] sm:$0xf]
  %v185 = vld [vmem:[%s1 + $0x190] sm:$0xf]
  %v186 = vld [vmem:[%s1 + $0x194] sm:$0xf]
  %v187 = vld [vmem:[%s1 + $0x198] sm:$0xf]
  %v188 = vld [vmem:[%s1 + $0x19c] sm:$0xf]
  %v189 = vld [vmem:[%s1 + $0x1a0] sm:$0xf]
  %v190 = vld [vmem:[%s1 + $0x1a4] sm:$0xf]
  %v191 = vld [vmem:[%s1 + $0x1a8] sm:$0xf]
  %v192 = vld [vmem:[%s1 + $0x1ac] sm:$0xf]
  %v193 = vld [vmem:[%s1 + $0x1b0] sm:$0xf]
  %v194 = vld [vmem:[%s1 + $0x1b4] sm:$0xf]
  %v195 = vld [vmem:[%s1 + $0x1b8] sm:$0xf]
  %v196 = vld [vmem:[%s1 + $0x1bc] sm:$0xf]
  %v197 = vld [vmem:[%s1 + $0x1c0] sm:$0xf]
  %v198 = vld [vmem:[%s1 + $0x1c4] sm:$0xf]
  %v199 = vld [vmem:[%s1 + $0x1c8] sm:$0xf]
  %v200 = vld [vmem:[%s1 + $0x1cc] sm:$0xf]
  %v201 = vld [vmem:[%s1 + $0x1d0] sm:$0xf]
  %v202 = vld [vmem:[%s1 + $0x1d4] sm:$0xf]
  %v203 = vld [vmem:[%s1 + $0x1d8] sm:$0xf]
  %v204 = vld [vmem:[%s1 + $0x1dc] sm:$0xf]
  %v205 = vld [vmem:[%s1 + $0x1e0] sm:$0xf]
  %v206 = vld [vmem:[%s1 + $0x1e4] sm:$0xf]
  %v207 = vld [vmem:[%s1 + $0x1e8] sm:$0xf]
  %v208 = vld [vmem:[%s1 + $0x1ec] sm:$0xf]
  %v209 = vld [vmem:[%s1 + $0x1f0] sm:$0xf]
  %v210 = vld [vmem:[%s1 + $0x1f4] sm:$0xf]
  %v211 = vld [vmem:[%s1 + $0x1f8] sm:$0xf]
  %v212 = vld [vmem:[%s1 + $0x1fc] sm:$0xf]
  %v213 = vld [vmem:[%s2] sm:$0x1]
  %v215 = vlaneseq
  %v216 = vshrl.u32 %v215, 7
  %v217 = vsub.s32 0, %v216
  %v218 = vrot.slane %v213, %v217
  %v284 = vunpack.c.l.b16 %v21
  %v285 = vunpack.c.h.b16 %v21
  %v286 = vunpack.c.l.b16 %v22
  %v287 = vunpack.c.h.b16 %v22
  %v288 = vunpack.c.l.b16 %v23
  %v289 = vunpack.c.h.b16 %v23
  %v290 = vunpack.c.l.b16 %v24
  %v291 = vunpack.c.h.b16 %v24
  %v292 = vunpack.c.l.b16 %v25
  %v293 = vunpack.c.h.b16 %v25
  %v294 = vunpack.c.l.b16 %v26
  %v295 = vunpack.c.h.b16 %v26
  %v296 = vunpack.c.l.b16 %v27
  %v297 = vunpack.c.h.b16 %v27
  %v298 = vunpack.c.l.b16 %v28
  %v299 = vunpack.c.h.b16 %v28
  %v300 = vunpack.c.l.b16 %v29
  %v301 = vunpack.c.h.b16 %v29
  %v302 = vunpack.c.l.b16 %v30
  %v303 = vunpack.c.h.b16 %v30
  %v304 = vunpack.c.l.b16 %v31
  %v305 = vunpack.c.h.b16 %v31
  %v306 = vunpack.c.l.b16 %v32
  %v307 = vunpack.c.h.b16 %v32
  %v308 = vunpack.c.l.b16 %v33
  %v309 = vunpack.c.h.b16 %v33
  %v310 = vunpack.c.l.b16 %v34
  %v311 = vunpack.c.h.b16 %v34
  %v312 = vunpack.c.l.b16 %v35
  %v313 = vunpack.c.h.b16 %v35
  %v314 = vunpack.c.l.b16 %v36
  %v315 = vunpack.c.h.b16 %v36
  %v316 = vunpack.c.l.b16 %v37
  %v317 = vunpack.c.h.b16 %v37
  %v318 = vunpack.c.l.b16 %v38
  %v319 = vunpack.c.h.b16 %v38
  %v320 = vunpack.c.l.b16 %v39
  %v321 = vunpack.c.h.b16 %v39
  %v322 = vunpack.c.l.b16 %v40
  %v323 = vunpack.c.h.b16 %v40
  %v324 = vunpack.c.l.b16 %v41
  %v325 = vunpack.c.h.b16 %v41
  %v326 = vunpack.c.l.b16 %v42
  %v327 = vunpack.c.h.b16 %v42
  %v328 = vunpack.c.l.b16 %v43
  %v329 = vunpack.c.h.b16 %v43
  %v330 = vunpack.c.l.b16 %v44
  %v331 = vunpack.c.h.b16 %v44
  %v332 = vunpack.c.l.b16 %v45
  %v333 = vunpack.c.h.b16 %v45
  %v334 = vunpack.c.l.b16 %v46
  %v335 = vunpack.c.h.b16 %v46
  %v336 = vunpack.c.l.b16 %v47
  %v337 = vunpack.c.h.b16 %v47
  %v338 = vunpack.c.l.b16 %v48
  %v339 = vunpack.c.h.b16 %v48
  %v340 = vunpack.c.l.b16 %v49
  %v341 = vunpack.c.h.b16 %v49
  %v342 = vunpack.c.l.b16 %v50
  %v343 = vunpack.c.h.b16 %v50
  %v344 = vunpack.c.l.b16 %v51
  %v345 = vunpack.c.h.b16 %v51
  %v346 = vunpack.c.l.b16 %v52
  %v347 = vunpack.c.h.b16 %v52
  %v348 = vunpack.c.l.b16 %v53
  %v349 = vunpack.c.h.b16 %v53
  %v350 = vunpack.c.l.b16 %v54
  %v351 = vunpack.c.h.b16 %v54
  %v352 = vunpack.c.l.b16 %v55
  %v353 = vunpack.c.h.b16 %v55
  %v354 = vunpack.c.l.b16 %v56
  %v355 = vunpack.c.h.b16 %v56
  %v356 = vunpack.c.l.b16 %v57
  %v357 = vunpack.c.h.b16 %v57
  %v358 = vunpack.c.l.b16 %v58
  %v359 = vunpack.c.h.b16 %v58
  %v360 = vunpack.c.l.b16 %v59
  %v361 = vunpack.c.h.b16 %v59
  %v362 = vunpack.c.l.b16 %v60
  %v363 = vunpack.c.h.b16 %v60
  %v364 = vunpack.c.l.b16 %v61
  %v365 = vunpack.c.h.b16 %v61
  %v366 = vunpack.c.l.b16 %v62
  %v367 = vunpack.c.h.b16 %v62
  %v368 = vunpack.c.l.b16 %v63
  %v369 = vunpack.c.h.b16 %v63
  %v370 = vunpack.c.l.b16 %v64
  %v371 = vunpack.c.h.b16 %v64
  %v372 = vunpack.c.l.b16 %v65
  %v373 = vunpack.c.h.b16 %v65
  %v374 = vunpack.c.l.b16 %v66
  %v375 = vunpack.c.h.b16 %v66
  %v376 = vunpack.c.l.b16 %v67
  %v377 = vunpack.c.h.b16 %v67
  %v378 = vunpack.c.l.b16 %v68
  %v379 = vunpack.c.h.b16 %v68
  %v380 = vunpack.c.l.b16 %v69
  %v381 = vunpack.c.h.b16 %v69
  %v382 = vunpack.c.l.b16 %v70
  %v383 = vunpack.c.h.b16 %v70
  %v384 = vunpack.c.l.b16 %v71
  %v385 = vunpack.c.h.b16 %v71
  %v386 = vunpack.c.l.b16 %v72
  %v387 = vunpack.c.h.b16 %v72
  %v388 = vunpack.c.l.b16 %v73
  %v389 = vunpack.c.h.b16 %v73
  %v390 = vunpack.c.l.b16 %v74
  %v391 = vunpack.c.h.b16 %v74
  %v392 = vunpack.c.l.b16 %v75
  %v393 = vunpack.c.h.b16 %v75
  %v394 = vunpack.c.l.b16 %v76
  %v395 = vunpack.c.h.b16 %v76
  %v396 = vunpack.c.l.b16 %v77
  %v397 = vunpack.c.h.b16 %v77
  %v398 = vunpack.c.l.b16 %v78
  %v399 = vunpack.c.h.b16 %v78
  %v400 = vunpack.c.l.b16 %v79
  %v401 = vunpack.c.h.b16 %v79
  %v402 = vunpack.c.l.b16 %v80
  %v403 = vunpack.c.h.b16 %v80
  %v404 = vunpack.c.l.b16 %v81
  %v405 = vunpack.c.h.b16 %v81
  %v406 = vunpack.c.l.b16 %v82
  %v407 = vunpack.c.h.b16 %v82
  %v408 = vunpack.c.l.b16 %v83
  %v409 = vunpack.c.h.b16 %v83
  %v410 = vunpack.c.l.b16 %v84
  %v411 = vunpack.c.h.b16 %v84
  %v412 = vpack.c.b16 %v292, %v284
  %v413 = vpack.c.b16 %v293, %v285
  %v414 = vpack.c.b16 %v294, %v286
  %v415 = vpack.c.b16 %v295, %v287
  %v416 = vpack.c.b16 %v296, %v288
  %v417 = vpack.c.b16 %v297, %v289
  %v418 = vpack.c.b16 %v298, %v290
  %v419 = vpack.c.b16 %v299, %v291
  %v420 = vpack.c.b16 %v308, %v300
  %v421 = vpack.c.b16 %v309, %v301
  %v422 = vpack.c.b16 %v310, %v302
  %v423 = vpack.c.b16 %v311, %v303
  %v424 = vpack.c.b16 %v312, %v304
  %v425 = vpack.c.b16 %v313, %v305
  %v426 = vpack.c.b16 %v314, %v306
  %v427 = vpack.c.b16 %v315, %v307
  %v428 = vpack.c.b16 %v324, %v316
  %v429 = vpack.c.b16 %v325, %v317
  %v430 = vpack.c.b16 %v326, %v318
  %v431 = vpack.c.b16 %v327, %v319
  %v432 = vpack.c.b16 %v328, %v320
  %v433 = vpack.c.b16 %v329, %v321
  %v434 = vpack.c.b16 %v330, %v322
  %v435 = vpack.c.b16 %v331, %v323
  %v436 = vpack.c.b16 %v340, %v332
  %v437 = vpack.c.b16 %v341, %v333
  %v438 = vpack.c.b16 %v342, %v334
  %v439 = vpack.c.b16 %v343, %v335
  %v440 = vpack.c.b16 %v344, %v336
  %v441 = vpack.c.b16 %v345, %v337
  %v442 = vpack.c.b16 %v346, %v338
  %v443 = vpack.c.b16 %v347, %v339
  %v444 = vpack.c.b16 %v356, %v348
  %v445 = vpack.c.b16 %v357, %v349
  %v446 = vpack.c.b16 %v358, %v350
  %v447 = vpack.c.b16 %v359, %v351
  %v448 = vpack.c.b16 %v360, %v352
  %v449 = vpack.c.b16 %v361, %v353
  %v450 = vpack.c.b16 %v362, %v354
  %v451 = vpack.c.b16 %v363, %v355
  %v452 = vpack.c.b16 %v372, %v364
  %v453 = vpack.c.b16 %v373, %v365
  %v454 = vpack.c.b16 %v374, %v366
  %v455 = vpack.c.b16 %v375, %v367
  %v456 = vpack.c.b16 %v376, %v368
  %v457 = vpack.c.b16 %v377, %v369
  %v458 = vpack.c.b16 %v378, %v370
  %v459 = vpack.c.b16 %v379, %v371
  %v460 = vpack.c.b16 %v388, %v380
  %v461 = vpack.c.b16 %v389, %v381
  %v462 = vpack.c.b16 %v390, %v382
  %v463 = vpack.c.b16 %v391, %v383
  %v464 = vpack.c.b16 %v392, %v384
  %v465 = vpack.c.b16 %v393, %v385
  %v466 = vpack.c.b16 %v394, %v386
  %v467 = vpack.c.b16 %v395, %v387
  %v468 = vpack.c.b16 %v404, %v396
  %v469 = vpack.c.b16 %v405, %v397
  %v470 = vpack.c.b16 %v406, %v398
  %v471 = vpack.c.b16 %v407, %v399
  %v472 = vpack.c.b16 %v408, %v400
  %v473 = vpack.c.b16 %v409, %v401
  %v474 = vpack.c.b16 %v410, %v402
  %v475 = vpack.c.b16 %v411, %v403
  %v668 = vunpack.c.l.b16 %v85
  %v669 = vunpack.c.l.b16 %v86
  %v670 = vunpack.c.l.b16 %v87
  %v671 = vunpack.c.l.b16 %v88
  %v672 = vunpack.c.l.b16 %v89
  %v673 = vunpack.c.l.b16 %v90
  %v674 = vunpack.c.l.b16 %v91
  %v675 = vunpack.c.l.b16 %v92
  %v676 = vunpack.c.l.b16 %v93
  %v677 = vunpack.c.l.b16 %v94
  %v678 = vunpack.c.l.b16 %v95
  %v679 = vunpack.c.l.b16 %v96
  %v680 = vunpack.c.l.b16 %v97
  %v681 = vunpack.c.l.b16 %v98
  %v682 = vunpack.c.l.b16 %v99
  %v683 = vunpack.c.l.b16 %v100
  %v684 = vunpack.c.l.b16 %v101
  %v685 = vunpack.c.l.b16 %v102
  %v686 = vunpack.c.l.b16 %v103
  %v687 = vunpack.c.l.b16 %v104
  %v688 = vunpack.c.l.b16 %v105
  %v689 = vunpack.c.l.b16 %v106
  %v690 = vunpack.c.l.b16 %v107
  %v691 = vunpack.c.l.b16 %v108
  %v692 = vunpack.c.l.b16 %v109
  %v693 = vunpack.c.l.b16 %v110
  %v694 = vunpack.c.l.b16 %v111
  %v695 = vunpack.c.l.b16 %v112
  %v696 = vunpack.c.l.b16 %v113
  %v697 = vunpack.c.l.b16 %v114
  %v698 = vunpack.c.l.b16 %v115
  %v699 = vunpack.c.l.b16 %v116
  %v700 = vunpack.c.l.b16 %v117
  %v701 = vunpack.c.l.b16 %v118
  %v702 = vunpack.c.l.b16 %v119
  %v703 = vunpack.c.l.b16 %v120
  %v704 = vunpack.c.l.b16 %v121
  %v705 = vunpack.c.l.b16 %v122
  %v706 = vunpack.c.l.b16 %v123
  %v707 = vunpack.c.l.b16 %v124
  %v708 = vunpack.c.l.b16 %v125
  %v709 = vunpack.c.l.b16 %v126
  %v710 = vunpack.c.l.b16 %v127
  %v711 = vunpack.c.l.b16 %v128
  %v712 = vunpack.c.l.b16 %v129
  %v713 = vunpack.c.l.b16 %v130
  %v714 = vunpack.c.l.b16 %v131
  %v715 = vunpack.c.l.b16 %v132
  %v716 = vunpack.c.l.b16 %v133
  %v717 = vunpack.c.l.b16 %v134
  %v718 = vunpack.c.l.b16 %v135
  %v719 = vunpack.c.l.b16 %v136
  %v720 = vunpack.c.l.b16 %v137
  %v721 = vunpack.c.l.b16 %v138
  %v722 = vunpack.c.l.b16 %v139
  %v723 = vunpack.c.l.b16 %v140
  %v724 = vunpack.c.l.b16 %v141
  %v725 = vunpack.c.l.b16 %v142
  %v726 = vunpack.c.l.b16 %v143
  %v727 = vunpack.c.l.b16 %v144
  %v728 = vunpack.c.l.b16 %v145
  %v729 = vunpack.c.l.b16 %v146
  %v730 = vunpack.c.l.b16 %v147
  %v731 = vunpack.c.l.b16 %v148
  %v732 = vunpack.c.l.b16 %v149
  %v733 = vunpack.c.l.b16 %v150
  %v734 = vunpack.c.l.b16 %v151
  %v735 = vunpack.c.l.b16 %v152
  %v736 = vunpack.c.l.b16 %v153
  %v737 = vunpack.c.l.b16 %v154
  %v738 = vunpack.c.l.b16 %v155
  %v739 = vunpack.c.l.b16 %v156
  %v740 = vunpack.c.l.b16 %v157
  %v741 = vunpack.c.l.b16 %v158
  %v742 = vunpack.c.l.b16 %v159
  %v743 = vunpack.c.l.b16 %v160
  %v744 = vunpack.c.l.b16 %v161
  %v745 = vunpack.c.l.b16 %v162
  %v746 = vunpack.c.l.b16 %v163
  %v747 = vunpack.c.l.b16 %v164
  %v748 = vunpack.c.l.b16 %v165
  %v749 = vunpack.c.l.b16 %v166
  %v750 = vunpack.c.l.b16 %v167
  %v751 = vunpack.c.l.b16 %v168
  %v752 = vunpack.c.l.b16 %v169
  %v753 = vunpack.c.l.b16 %v170
  %v754 = vunpack.c.l.b16 %v171
  %v755 = vunpack.c.l.b16 %v172
  %v756 = vunpack.c.l.b16 %v173
  %v757 = vunpack.c.l.b16 %v174
  %v758 = vunpack.c.l.b16 %v175
  %v759 = vunpack.c.l.b16 %v176
  %v760 = vunpack.c.l.b16 %v177
  %v761 = vunpack.c.l.b16 %v178
  %v762 = vunpack.c.l.b16 %v179
  %v763 = vunpack.c.l.b16 %v180
  %v764 = vunpack.c.l.b16 %v181
  %v765 = vunpack.c.l.b16 %v182
  %v766 = vunpack.c.l.b16 %v183
  %v767 = vunpack.c.l.b16 %v184
  %v768 = vunpack.c.l.b16 %v185
  %v769 = vunpack.c.l.b16 %v186
  %v770 = vunpack.c.l.b16 %v187
  %v771 = vunpack.c.l.b16 %v188
  %v772 = vunpack.c.l.b16 %v189
  %v773 = vunpack.c.l.b16 %v190
  %v774 = vunpack.c.l.b16 %v191
  %v775 = vunpack.c.l.b16 %v192
  %v776 = vunpack.c.l.b16 %v193
  %v777 = vunpack.c.l.b16 %v194
  %v778 = vunpack.c.l.b16 %v195
  %v779 = vunpack.c.l.b16 %v196
  %v780 = vunpack.c.l.b16 %v197
  %v781 = vunpack.c.l.b16 %v198
  %v782 = vunpack.c.l.b16 %v199
  %v783 = vunpack.c.l.b16 %v200
  %v784 = vunpack.c.l.b16 %v201
  %v785 = vunpack.c.l.b16 %v202
  %v786 = vunpack.c.l.b16 %v203
  %v787 = vunpack.c.l.b16 %v204
  %v788 = vunpack.c.l.b16 %v205
  %v789 = vunpack.c.l.b16 %v206
  %v790 = vunpack.c.l.b16 %v207
  %v791 = vunpack.c.l.b16 %v208
  %v792 = vunpack.c.l.b16 %v209
  %v793 = vunpack.c.l.b16 %v210
  %v794 = vunpack.c.l.b16 %v211
  %v795 = vunpack.c.l.b16 %v212
  %v796 = vpack.c.b16 %v669, %v668
  %v797 = vpack.c.b16 %v671, %v670
  %v798 = vpack.c.b16 %v673, %v672
  %v799 = vpack.c.b16 %v675, %v674
  %v800 = vpack.c.b16 %v677, %v676
  %v801 = vpack.c.b16 %v679, %v678
  %v802 = vpack.c.b16 %v681, %v680
  %v803 = vpack.c.b16 %v683, %v682
  %v804 = vpack.c.b16 %v685, %v684
  %v805 = vpack.c.b16 %v687, %v686
  %v806 = vpack.c.b16 %v689, %v688
  %v807 = vpack.c.b16 %v691, %v690
  %v808 = vpack.c.b16 %v693, %v692
  %v809 = vpack.c.b16 %v695, %v694
  %v810 = vpack.c.b16 %v697, %v696
  %v811 = vpack.c.b16 %v699, %v698
  %v812 = vpack.c.b16 %v701, %v700
  %v813 = vpack.c.b16 %v703, %v702
  %v814 = vpack.c.b16 %v705, %v704
  %v815 = vpack.c.b16 %v707, %v706
  %v816 = vpack.c.b16 %v709, %v708
  %v817 = vpack.c.b16 %v711, %v710
  %v818 = vpack.c.b16 %v713, %v712
  %v819 = vpack.c.b16 %v715, %v714
  %v820 = vpack.c.b16 %v717, %v716
  %v821 = vpack.c.b16 %v719, %v718
  %v822 = vpack.c.b16 %v721, %v720
  %v823 = vpack.c.b16 %v723, %v722
  %v824 = vpack.c.b16 %v725, %v724
  %v825 = vpack.c.b16 %v727, %v726
  %v826 = vpack.c.b16 %v729, %v728
  %v827 = vpack.c.b16 %v731, %v730
  %v828 = vpack.c.b16 %v733, %v732
  %v829 = vpack.c.b16 %v735, %v734
  %v830 = vpack.c.b16 %v737, %v736
  %v831 = vpack.c.b16 %v739, %v738
  %v832 = vpack.c.b16 %v741, %v740
  %v833 = vpack.c.b16 %v743, %v742
  %v834 = vpack.c.b16 %v745, %v744
  %v835 = vpack.c.b16 %v747, %v746
  %v836 = vpack.c.b16 %v749, %v748
  %v837 = vpack.c.b16 %v751, %v750
  %v838 = vpack.c.b16 %v753, %v752
  %v839 = vpack.c.b16 %v755, %v754
  %v840 = vpack.c.b16 %v757, %v756
  %v841 = vpack.c.b16 %v759, %v758
  %v842 = vpack.c.b16 %v761, %v760
  %v843 = vpack.c.b16 %v763, %v762
  %v844 = vpack.c.b16 %v765, %v764
  %v845 = vpack.c.b16 %v767, %v766
  %v846 = vpack.c.b16 %v769, %v768
  %v847 = vpack.c.b16 %v771, %v770
  %v848 = vpack.c.b16 %v773, %v772
  %v849 = vpack.c.b16 %v775, %v774
  %v850 = vpack.c.b16 %v777, %v776
  %v851 = vpack.c.b16 %v779, %v778
  %v852 = vpack.c.b16 %v781, %v780
  %v853 = vpack.c.b16 %v783, %v782
  %v854 = vpack.c.b16 %v785, %v784
  %v855 = vpack.c.b16 %v787, %v786
  %v856 = vpack.c.b16 %v789, %v788
  %v857 = vpack.c.b16 %v791, %v790
  %v858 = vpack.c.b16 %v793, %v792
  %v859 = vpack.c.b16 %v795, %v794
  %924 = vmatprep.subr.bf16.mxu0 0
  %925 = vmatpush1.bf16.msra.mxu0 %v796
  %926 = vmatprep.subr.bf16.mxu0 0
  %927 = vmatpush1.bf16.msra.mxu0 %v797
  %928 = vmatprep.subr.bf16.mxu0 0
  %929 = vmatpush1.bf16.msra.mxu0 %v798
  %930 = vmatprep.subr.bf16.mxu0 0
  %931 = vmatpush1.bf16.msra.mxu0 %v799
  %932 = vmatprep.subr.bf16.mxu0 0
  %933 = vmatpush1.bf16.msra.mxu0 %v800
  %934 = vmatprep.subr.bf16.mxu0 0
  %935 = vmatpush1.bf16.msra.mxu0 %v801
  %936 = vmatprep.subr.bf16.mxu0 0
  %937 = vmatpush1.bf16.msra.mxu0 %v802
  %938 = vmatprep.subr.bf16.mxu0 0
  %939 = vmatpush1.bf16.msra.mxu0 %v803
  %940 = vmatprep.subr.bf16.mxu0 0
  %941 = vmatpush1.bf16.msra.mxu0 %v804
  %942 = vmatprep.subr.bf16.mxu0 0
  %943 = vmatpush1.bf16.msra.mxu0 %v805
  %944 = vmatprep.subr.bf16.mxu0 0
  %945 = vmatpush1.bf16.msra.mxu0 %v806
  %946 = vmatprep.subr.bf16.mxu0 0
  %947 = vmatpush1.bf16.msra.mxu0 %v807
  %948 = vmatprep.subr.bf16.mxu0 0
  %949 = vmatpush1.bf16.msra.mxu0 %v808
  %950 = vmatprep.subr.bf16.mxu0 0
  %951 = vmatpush1.bf16.msra.mxu0 %v809
  %952 = vmatprep.subr.bf16.mxu0 0
  %953 = vmatpush1.bf16.msra.mxu0 %v810
  %954 = vmatprep.subr.bf16.mxu0 0
  %955 = vmatpush1.bf16.msra.mxu0 %v811
  %956 = vmatprep.mubr.bf16.mxu0 %v413
  %957 = vmatmul.mubr.bf16.gmra.mrb[0].mxu0 %v412
  %v958 = vpop.f32.mrb[0].mxu0
  %v959 = vadd.f32 %v218, %v958
  %v960 = vpop.f32.mrb[0].mxu0
  %v961 = vpop.f32.mrb[0].mxu0
  %v962 = vadd.f32 %v218, %v961
  %v963 = vpop.f32.mrb[0].mxu0
  %964 = vmatprep.mubr.bf16.mxu0 %v421
  %965 = vmatmul.mubr.bf16.gmra.mrb[0].mxu0 %v420
  %v966 = vpop.f32.mrb[0].mxu0
  %v967 = vadd.f32 %v218, %v966
  %v968 = vpop.f32.mrb[0].mxu0
  %v969 = vpop.f32.mrb[0].mxu0
  %v970 = vadd.f32 %v218, %v969
  %v971 = vpop.f32.mrb[0].mxu0
  %972 = vmatprep.mubr.bf16.mxu0 %v429
  %973 = vmatmul.mubr.bf16.gmra.mrb[0].mxu0 %v428
  %v974 = vpop.f32.mrb[0].mxu0
  %v975 = vadd.f32 %v218, %v974
  %v976 = vpop.f32.mrb[0].mxu0
  %v977 = vpop.f32.mrb[0].mxu0
  %v978 = vadd.f32 %v218, %v977
  %v979 = vpop.f32.mrb[0].mxu0
  %980 = vmatprep.mubr.bf16.mxu0 %v437
  %981 = vmatmul.mubr.bf16.gmra.mrb[0].mxu0 %v436
  %v982 = vpop.f32.mrb[0].mxu0
  %v983 = vadd.f32 %v218, %v982
  %v984 = vpop.f32.mrb[0].mxu0
  %v985 = vpop.f32.mrb[0].mxu0
  %v986 = vadd.f32 %v218, %v985
  %v987 = vpop.f32.mrb[0].mxu0
  %988 = vmatprep.mubr.bf16.mxu0 %v445
  %989 = vmatmul.mubr.bf16.gmra.mrb[0].mxu0 %v444
  %v990 = vpop.f32.mrb[0].mxu0
  %v991 = vadd.f32 %v218, %v990
  %v992 = vpop.f32.mrb[0].mxu0
  %v993 = vpop.f32.mrb[0].mxu0
  %v994 = vadd.f32 %v218, %v993
  %v995 = vpop.f32.mrb[0].mxu0
  %996 = vmatprep.mubr.bf16.mxu0 %v453
  %997 = vmatmul.mubr.bf16.gmra.mrb[0].mxu0 %v452
  %v998 = vpop.f32.mrb[0].mxu0
  %v999 = vadd.f32 %v218, %v998
  %v1000 = vpop.f32.mrb[0].mxu0
  %v1001 = vpop.f32.mrb[0].mxu0
  %v1002 = vadd.f32 %v218, %v1001
  %v1003 = vpop.f32.mrb[0].mxu0
  %1004 = vmatprep.mubr.bf16.mxu0 %v461
  %1005 = vmatmul.mubr.bf16.gmra.mrb[0].mxu0 %v460
  %v1006 = vpop.f32.mrb[0].mxu0
  %v1007 = vadd.f32 %v218, %v1006
  %v1008 = vpop.f32.mrb[0].mxu0
  %v1009 = vpop.f32.mrb[0].mxu0
  %v1010 = vadd.f32 %v218, %v1009
  %v1011 = vpop.f32.mrb[0].mxu0
  %1012 = vmatprep.mubr.bf16.mxu0 %v469
  %1013 = vmatmul.mubr.bf16.gmra.mrb[0].mxu0 %v468
  %v1014 = vpop.f32.mrb[0].mxu0
  %v1015 = vadd.f32 %v218, %v1014
  %v1016 = vpop.f32.mrb[0].mxu0
  %v1017 = vpop.f32.mrb[0].mxu0
  %v1018 = vadd.f32 %v218, %v1017
  %v1019 = vpop.f32.mrb[0].mxu0
  %1020 = vdwg.mxu0
  %1021 = vmatprep.subr.bf16.mxu0 0
  %1022 = vmatpush1.bf16.msra.mxu0 %v812
  %1023 = vmatprep.subr.bf16.mxu0 0
  %1024 = vmatpush1.bf16.msra.mxu0 %v813
  %1025 = vmatprep.subr.bf16.mxu0 0
  %1026 = vmatpush1.bf16.msra.mxu0 %v814
  %1027 = vmatprep.subr.bf16.mxu0 0
  %1028 = vmatpush1.bf16.msra.mxu0 %v815
  %1029 = vmatprep.subr.bf16.mxu0 0
  %1030 = vmatpush1.bf16.msra.mxu0 %v816
  %1031 = vmatprep.subr.bf16.mxu0 0
  %1032 = vmatpush1.bf16.msra.mxu0 %v817
  %1033 = vmatprep.subr.bf16.mxu0 0
  %1034 = vmatpush1.bf16.msra.mxu0 %v818
  %1035 = vmatprep.subr.bf16.mxu0 0
  %1036 = vmatpush1.bf16.msra.mxu0 %v819
  %1037 = vmatprep.subr.bf16.mxu0 0
  %1038 = vmatpush1.bf16.msra.mxu0 %v820
  %1039 = vmatprep.subr.bf16.mxu0 0
  %1040 = vmatpush1.bf16.msra.mxu0 %v821
  %1041 = vmatprep.subr.bf16.mxu0 0
  %1042 = vmatpush1.bf16.msra.mxu0 %v822
  %1043 = vmatprep.subr.bf16.mxu0 0
  %1044 = vmatpush1.bf16.msra.mxu0 %v823
  %1045 = vmatprep.subr.bf16.mxu0 0
  %1046 = vmatpush1.bf16.msra.mxu0 %v824
  %1047 = vmatprep.subr.bf16.mxu0 0
  %1048 = vmatpush1.bf16.msra.mxu0 %v825
  %1049 = vmatprep.subr.bf16.mxu0 0
  %1050 = vmatpush1.bf16.msra.mxu0 %v826
  %1051 = vmatprep.subr.bf16.mxu0 0
  %1052 = vmatpush1.bf16.msra.mxu0 %v827
  %1053 = vmatprep.mubr.bf16.mxu0 %v415
  %1054 = vmatmul.mubr.bf16.gmra.mrb[0].mxu0 %v414
  %v1055 = vpop.f32.mrb[0].mxu0
  %v1056 = vadd.f32 %v959, %v1055
  %v1057 = vpop.f32.mrb[0].mxu0
  %v1058 = vpop.f32.mrb[0].mxu0
  %v1059 = vadd.f32 %v962, %v1058
  %v1060 = vpop.f32.mrb[0].mxu0
  %1061 = vmatprep.mubr.bf16.mxu0 %v423
  %1062 = vmatmul.mubr.bf16.gmra.mrb[0].mxu0 %v422
  %v1063 = vpop.f32.mrb[0].mxu0
  %v1064 = vadd.f32 %v967, %v1063
  %v1065 = vpop.f32.mrb[0].mxu0
  %v1066 = vpop.f32.mrb[0].mxu0
  %v1067 = vadd.f32 %v970, %v1066
  %v1068 = vpop.f32.mrb[0].mxu0
  %1069 = vmatprep.mubr.bf16.mxu0 %v431
  %1070 = vmatmul.mubr.bf16.gmra.mrb[0].mxu0 %v430
  %v1071 = vpop.f32.mrb[0].mxu0
  %v1072 = vadd.f32 %v975, %v1071
  %v1073 = vpop.f32.mrb[0].mxu0
  %v1074 = vpop.f32.mrb[0].mxu0
  %v1075 = vadd.f32 %v978, %v1074
  %v1076 = vpop.f32.mrb[0].mxu0
  %1077 = vmatprep.mubr.bf16.mxu0 %v439
  %1078 = vmatmul.mubr.bf16.gmra.mrb[0].mxu0 %v438
  %v1079 = vpop.f32.mrb[0].mxu0
  %v1080 = vadd.f32 %v983, %v1079
  %v1081 = vpop.f32.mrb[0].mxu0
  %v1082 = vpop.f32.mrb[0].mxu0
  %v1083 = vadd.f32 %v986, %v1082
  %v1084 = vpop.f32.mrb[0].mxu0
  %1085 = vmatprep.mubr.bf16.mxu0 %v447
  %1086 = vmatmul.mubr.bf16.gmra.mrb[0].mxu0 %v446
  %v1087 = vpop.f32.mrb[0].mxu0
  %v1088 = vadd.f32 %v991, %v1087
  %v1089 = vpop.f32.mrb[0].mxu0
  %v1090 = vpop.f32.mrb[0].mxu0
  %v1091 = vadd.f32 %v994, %v1090
  %v1092 = vpop.f32.mrb[0].mxu0
  %1093 = vmatprep.mubr.bf16.mxu0 %v455
  %1094 = vmatmul.mubr.bf16.gmra.mrb[0].mxu0 %v454
  %v1095 = vpop.f32.mrb[0].mxu0
  %v1096 = vadd.f32 %v999, %v1095
  %v1097 = vpop.f32.mrb[0].mxu0
  %v1098 = vpop.f32.mrb[0].mxu0
  %v1099 = vadd.f32 %v1002, %v1098
  %v1100 = vpop.f32.mrb[0].mxu0
  %1101 = vmatprep.mubr.bf16.mxu0 %v463
  %1102 = vmatmul.mubr.bf16.gmra.mrb[0].mxu0 %v462
  %v1103 = vpop.f32.mrb[0].mxu0
  %v1104 = vadd.f32 %v1007, %v1103
  %v1105 = vpop.f32.mrb[0].mxu0
  %v1106 = vpop.f32.mrb[0].mxu0
  %v1107 = vadd.f32 %v1010, %v1106
  %v1108 = vpop.f32.mrb[0].mxu0
  %1109 = vmatprep.mubr.bf16.mxu0 %v471
  %1110 = vmatmul.mubr.bf16.gmra.mrb[0].mxu0 %v470
  %v1111 = vpop.f32.mrb[0].mxu0
  %v1112 = vadd.f32 %v1015, %v1111
  %v1113 = vpop.f32.mrb[0].mxu0
  %v1114 = vpop.f32.mrb[0].mxu0
  %v1115 = vadd.f32 %v1018, %v1114
  %v1116 = vpop.f32.mrb[0].mxu0
  %1117 = vdwg.mxu0
  %1118 = vmatprep.subr.bf16.mxu0 0
  %1119 = vmatpush1.bf16.msra.mxu0 %v828
  %1120 = vmatprep.subr.bf16.mxu0 0
  %1121 = vmatpush1.bf16.msra.mxu0 %v829
  %1122 = vmatprep.subr.bf16.mxu0 0
  %1123 = vmatpush1.bf16.msra.mxu0 %v830
  %1124 = vmatprep.subr.bf16.mxu0 0
  %1125 = vmatpush1.bf16.msra.mxu0 %v831
  %1126 = vmatprep.subr.bf16.mxu0 0
  %1127 = vmatpush1.bf16.msra.mxu0 %v832
  %1128 = vmatprep.subr.bf16.mxu0 0
  %1129 = vmatpush1.bf16.msra.mxu0 %v833
  %1130 = vmatprep.subr.bf16.mxu0 0
  %1131 = vmatpush1.bf16.msra.mxu0 %v834
  %1132 = vmatprep.subr.bf16.mxu0 0
  %1133 = vmatpush1.bf16.msra.mxu0 %v835
  %1134 = vmatprep.subr.bf16.mxu0 0
  %1135 = vmatpush1.bf16.msra.mxu0 %v836
  %1136 = vmatprep.subr.bf16.mxu0 0
  %1137 = vmatpush1.bf16.msra.mxu0 %v837
  %1138 = vmatprep.subr.bf16.mxu0 0
  %1139 = vmatpush1.bf16.msra.mxu0 %v838
  %1140 = vmatprep.subr.bf16.mxu0 0
  %1141 = vmatpush1.bf16.msra.mxu0 %v839
  %1142 = vmatprep.subr.bf16.mxu0 0
  %1143 = vmatpush1.bf16.msra.mxu0 %v840
  %1144 = vmatprep.subr.bf16.mxu0 0
  %1145 = vmatpush1.bf16.msra.mxu0 %v841
  %1146 = vmatprep.subr.bf16.mxu0 0
  %1147 = vmatpush1.bf16.msra.mxu0 %v842
  %1148 = vmatprep.subr.bf16.mxu0 0
  %1149 = vmatpush1.bf16.msra.mxu0 %v843
  %1150 = vmatprep.mubr.bf16.mxu0 %v417
  %1151 = vmatmul.mubr.bf16.gmra.mrb[0].mxu0 %v416
  %v1152 = vpop.f32.mrb[0].mxu0
  %v1153 = vadd.f32 %v1056, %v1152
  %v1154 = vpop.f32.mrb[0].mxu0
  %v1155 = vpop.f32.mrb[0].mxu0
  %v1156 = vadd.f32 %v1059, %v1155
  %v1157 = vpop.f32.mrb[0].mxu0
  %1158 = vmatprep.mubr.bf16.mxu0 %v425
  %1159 = vmatmul.mubr.bf16.gmra.mrb[0].mxu0 %v424
  %v1160 = vpop.f32.mrb[0].mxu0
  %v1161 = vadd.f32 %v1064, %v1160
  %v1162 = vpop.f32.mrb[0].mxu0
  %v1163 = vpop.f32.mrb[0].mxu0
  %v1164 = vadd.f32 %v1067, %v1163
  %v1165 = vpop.f32.mrb[0].mxu0
  %1166 = vmatprep.mubr.bf16.mxu0 %v433
  %1167 = vmatmul.mubr.bf16.gmra.mrb[0].mxu0 %v432
  %v1168 = vpop.f32.mrb[0].mxu0
  %v1169 = vadd.f32 %v1072, %v1168
  %v1170 = vpop.f32.mrb[0].mxu0
  %v1171 = vpop.f32.mrb[0].mxu0
  %v1172 = vadd.f32 %v1075, %v1171
  %v1173 = vpop.f32.mrb[0].mxu0
  %1174 = vmatprep.mubr.bf16.mxu0 %v441
  %1175 = vmatmul.mubr.bf16.gmra.mrb[0].mxu0 %v440
  %v1176 = vpop.f32.mrb[0].mxu0
  %v1177 = vadd.f32 %v1080, %v1176
  %v1178 = vpop.f32.mrb[0].mxu0
  %v1179 = vpop.f32.mrb[0].mxu0
  %v1180 = vadd.f32 %v1083, %v1179
  %v1181 = vpop.f32.mrb[0].mxu0
  %1182 = vmatprep.mubr.bf16.mxu0 %v449
  %1183 = vmatmul.mubr.bf16.gmra.mrb[0].mxu0 %v448
  %v1184 = vpop.f32.mrb[0].mxu0
  %v1185 = vadd.f32 %v1088, %v1184
  %v1186 = vpop.f32.mrb[0].mxu0
  %v1187 = vpop.f32.mrb[0].mxu0
  %v1188 = vadd.f32 %v1091, %v1187
  %v1189 = vpop.f32.mrb[0].mxu0
  %1190 = vmatprep.mubr.bf16.mxu0 %v457
  %1191 = vmatmul.mubr.bf16.gmra.mrb[0].mxu0 %v456
  %v1192 = vpop.f32.mrb[0].mxu0
  %v1193 = vadd.f32 %v1096, %v1192
  %v1194 = vpop.f32.mrb[0].mxu0
  %v1195 = vpop.f32.mrb[0].mxu0
  %v1196 = vadd.f32 %v1099, %v1195
  %v1197 = vpop.f32.mrb[0].mxu0
  %1198 = vmatprep.mubr.bf16.mxu0 %v465
  %1199 = vmatmul.mubr.bf16.gmra.mrb[0].mxu0 %v464
  %v1200 = vpop.f32.mrb[0].mxu0
  %v1201 = vadd.f32 %v1104, %v1200
  %v1202 = vpop.f32.mrb[0].mxu0
  %v1203 = vpop.f32.mrb[0].mxu0
  %v1204 = vadd.f32 %v1107, %v1203
  %v1205 = vpop.f32.mrb[0].mxu0
  %1206 = vmatprep.mubr.bf16.mxu0 %v473
  %1207 = vmatmul.mubr.bf16.gmra.mrb[0].mxu0 %v472
  %v1208 = vpop.f32.mrb[0].mxu0
  %v1209 = vadd.f32 %v1112, %v1208
  %v1210 = vpop.f32.mrb[0].mxu0
  %v1211 = vpop.f32.mrb[0].mxu0
  %v1212 = vadd.f32 %v1115, %v1211
  %v1213 = vpop.f32.mrb[0].mxu0
  %1214 = vdwg.mxu0
  %1215 = vmatprep.subr.bf16.mxu0 0
  %1216 = vmatpush1.bf16.msra.mxu0 %v844
  %1217 = vmatprep.subr.bf16.mxu0 0
  %1218 = vmatpush1.bf16.msra.mxu0 %v845
  %1219 = vmatprep.subr.bf16.mxu0 0
  %1220 = vmatpush1.bf16.msra.mxu0 %v846
  %1221 = vmatprep.subr.bf16.mxu0 0
  %1222 = vmatpush1.bf16.msra.mxu0 %v847
  %1223 = vmatprep.subr.bf16.mxu0 0
  %1224 = vmatpush1.bf16.msra.mxu0 %v848
  %1225 = vmatprep.subr.bf16.mxu0 0
  %1226 = vmatpush1.bf16.msra.mxu0 %v849
  %1227 = vmatprep.subr.bf16.mxu0 0
  %1228 = vmatpush1.bf16.msra.mxu0 %v850
  %1229 = vmatprep.subr.bf16.mxu0 0
  %1230 = vmatpush1.bf16.msra.mxu0 %v851
  %1231 = vmatprep.subr.bf16.mxu0 0
  %1232 = vmatpush1.bf16.msra.mxu0 %v852
  %1233 = vmatprep.subr.bf16.mxu0 0
  %1234 = vmatpush1.bf16.msra.mxu0 %v853
  %1235 = vmatprep.subr.bf16.mxu0 0
  %1236 = vmatpush1.bf16.msra.mxu0 %v854
  %1237 = vmatprep.subr.bf16.mxu0 0
  %1238 = vmatpush1.bf16.msra.mxu0 %v855
  %1239 = vmatprep.subr.bf16.mxu0 0
  %1240 = vmatpush1.bf16.msra.mxu0 %v856
  %1241 = vmatprep.subr.bf16.mxu0 0
  %1242 = vmatpush1.bf16.msra.mxu0 %v857
  %1243 = vmatprep.subr.bf16.mxu0 0
  %1244 = vmatpush1.bf16.msra.mxu0 %v858
  %1245 = vmatprep.subr.bf16.mxu0 0
  %1246 = vmatpush1.bf16.msra.mxu0 %v859
  %1247 = vmatprep.mubr.bf16.mxu0 %v419
  %1248 = vmatmul.mubr.bf16.gmra.mrb[0].mxu0 %v418
  %v1249 = vpop.f32.mrb[0].mxu0
  %v1250 = vadd.f32 %v1153, %v1249
  %v1251 = vpop.f32.mrb[0].mxu0
  %v1252 = vpop.f32.mrb[0].mxu0
  %v1253 = vadd.f32 %v1156, %v1252
  %v1254 = vpop.f32.mrb[0].mxu0
  %1255 = vmatprep.mubr.bf16.mxu0 %v427
  %1256 = vmatmul.mubr.bf16.gmra.mrb[0].mxu0 %v426
  %v1257 = vpop.f32.mrb[0].mxu0
  %v1258 = vadd.f32 %v1161, %v1257
  %v1259 = vpop.f32.mrb[0].mxu0
  %v1260 = vpop.f32.mrb[0].mxu0
  %v1261 = vadd.f32 %v1164, %v1260
  %v1262 = vpop.f32.mrb[0].mxu0
  %1263 = vmatprep.mubr.bf16.mxu0 %v435
  %1264 = vmatmul.mubr.bf16.gmra.mrb[0].mxu0 %v434
  %v1265 = vpop.f32.mrb[0].mxu0
  %v1266 = vadd.f32 %v1169, %v1265
  %v1267 = vpop.f32.mrb[0].mxu0
  %v1268 = vpop.f32.mrb[0].mxu0
  %v1269 = vadd.f32 %v1172, %v1268
  %v1270 = vpop.f32.mrb[0].mxu0
  %1271 = vmatprep.mubr.bf16.mxu0 %v443
  %1272 = vmatmul.mubr.bf16.gmra.mrb[0].mxu0 %v442
  %v1273 = vpop.f32.mrb[0].mxu0
  %v1274 = vadd.f32 %v1177, %v1273
  %v1275 = vpop.f32.mrb[0].mxu0
  %v1276 = vpop.f32.mrb[0].mxu0
  %v1277 = vadd.f32 %v1180, %v1276
  %v1278 = vpop.f32.mrb[0].mxu0
  %1279 = vmatprep.mubr.bf16.mxu0 %v451
  %1280 = vmatmul.mubr.bf16.gmra.mrb[0].mxu0 %v450
  %v1281 = vpop.f32.mrb[0].mxu0
  %v1282 = vadd.f32 %v1185, %v1281
  %v1283 = vpop.f32.mrb[0].mxu0
  %v1284 = vpop.f32.mrb[0].mxu0
  %v1285 = vadd.f32 %v1188, %v1284
  %v1286 = vpop.f32.mrb[0].mxu0
  %1287 = vmatprep.mubr.bf16.mxu0 %v459
  %1288 = vmatmul.mubr.bf16.gmra.mrb[0].mxu0 %v458
  %v1289 = vpop.f32.mrb[0].mxu0
  %v1290 = vadd.f32 %v1193, %v1289
  %v1291 = vpop.f32.mrb[0].mxu0
  %v1292 = vpop.f32.mrb[0].mxu0
  %v1293 = vadd.f32 %v1196, %v1292
  %v1294 = vpop.f32.mrb[0].mxu0
  %1295 = vmatprep.mubr.bf16.mxu0 %v467
  %1296 = vmatmul.mubr.bf16.gmra.mrb[0].mxu0 %v466
  %v1297 = vpop.f32.mrb[0].mxu0
  %v1298 = vadd.f32 %v1201, %v1297
  %v1299 = vpop.f32.mrb[0].mxu0
  %v1300 = vpop.f32.mrb[0].mxu0
  %v1301 = vadd.f32 %v1204, %v1300
  %v1302 = vpop.f32.mrb[0].mxu0
  %1303 = vmatprep.mubr.bf16.mxu0 %v475
  %1304 = vmatmul.mubr.bf16.gmra.mrb[0].mxu0 %v474
  %v1305 = vpop.f32.mrb[0].mxu0
  %v1306 = vadd.f32 %v1209, %v1305
  %v1307 = vpop.f32.mrb[0].mxu0
  %v1308 = vpop.f32.mrb[0].mxu0
  %v1309 = vadd.f32 %v1212, %v1308
  %v1310 = vpop.f32.mrb[0].mxu0
  %1311 = vdwg.mxu0
  %v1312 = vmax.f32 %v1250, 0.0
  %v1313 = vmax.f32 %v1253, 0.0
  %v1314 = vmax.f32 %v1258, 0.0
  %v1315 = vmax.f32 %v1261, 0.0
  %v1316 = vmax.f32 %v1266, 0.0
  %v1317 = vmax.f32 %v1269, 0.0
  %v1318 = vmax.f32 %v1274, 0.0
  %v1319 = vmax.f32 %v1277, 0.0
  %v1320 = vmax.f32 %v1282, 0.0
  %v1321 = vmax.f32 %v1285, 0.0
  %v1322 = vmax.f32 %v1290, 0.0
  %v1323 = vmax.f32 %v1293, 0.0
  %v1324 = vmax.f32 %v1298, 0.0
  %v1325 = vmax.f32 %v1301, 0.0
  %v1326 = vmax.f32 %v1306, 0.0
  %v1327 = vmax.f32 %v1309, 0.0
  %v1328 = vld [vmem:[%s3] sm:$0xff]
  %v1329 = vld [vmem:[%s3 + $0x8] sm:$0xff]
  %v1330 = vld [vmem:[%s3 + $0x10] sm:$0xff]
  %v1331 = vld [vmem:[%s3 + $0x18] sm:$0xff]
  %v1332 = vld [vmem:[%s4] sm:$0x1]
  %v1334 = vlaneseq
  %v1335 = vshrl.u32 %v1334, 7
  %v1336 = vsub.s32 0, %v1335
  %v1337 = vrot.slane %v1332, %v1336
  %vm1339 = vcmask 261120
  %v1341 = vsel %vm1339, %v1312, 0
  %v1344 = vsel %vm1339, %v1313, 0
  %v1347 = vsel %vm1339, %v1314, 0
  %v1350 = vsel %vm1339, %v1315, 0
  %v1353 = vsel %vm1339, %v1316, 0
  %v1356 = vsel %vm1339, %v1317, 0
  %v1359 = vsel %vm1339, %v1318, 0
  %v1362 = vsel %vm1339, %v1319, 0
  %v1365 = vsel %vm1339, %v1320, 0
  %v1368 = vsel %vm1339, %v1321, 0
  %v1371 = vsel %vm1339, %v1322, 0
  %v1374 = vsel %vm1339, %v1323, 0
  %v1377 = vsel %vm1339, %v1324, 0
  %v1380 = vsel %vm1339, %v1325, 0
  %v1383 = vsel %vm1339, %v1326, 0
  %v1386 = vsel %vm1339, %v1327, 0
  %1388 = vmatprep.subr.mxu0 0.0
  %1389 = vmatpush1.msra.mxu0 %v1328
  %1390 = vmatprep.subr.mxu0 0.0
  %1391 = vmatpush1.msra.mxu0 %v1329
  %1392 = vmatprep.subr.mxu0 0.0
  %1393 = vmatpush1.msra.mxu0 %v1330
  %1394 = vmatprep.subr.mxu0 0.0
  %1395 = vmatpush1.msra.mxu0 %v1331
  %1396 = vmatprep.subr.mxu0 0.0
  %1397 = vmatpush1.msra.mxu0 0.0
  %1398 = vmatprep.subr.mxu0 0.0
  %1399 = vmatpush1.msra.mxu0 0.0
  %1400 = vmatprep.subr.mxu0 0.0
  %1401 = vmatpush1.msra.mxu0 0.0
  %1402 = vmatprep.subr.mxu0 0.0
  %1403 = vmatpush1.msra.mxu0 0.0
  %1404 = vmatprep.subr.mxu0 0.0
  %1405 = vmatpush1.msra.mxu0 0.0
  %1406 = vmatprep.subr.mxu0 0.0
  %1407 = vmatpush1.msra.mxu0 0.0
  %1408 = vmatprep.subr.mxu0 0.0
  %1409 = vmatpush1.msra.mxu0 0.0
  %1410 = vmatprep.subr.mxu0 0.0
  %1411 = vmatpush1.msra.mxu0 0.0
  %1412 = vmatprep.subr.mxu0 0.0
  %1413 = vmatpush1.msra.mxu0 0.0
  %1414 = vmatprep.subr.mxu0 0.0
  %1415 = vmatpush1.msra.mxu0 0.0
  %1416 = vmatprep.subr.mxu0 0.0
  %1417 = vmatpush1.msra.mxu0 0.0
  %1418 = vmatprep.subr.mxu0 0.0
  %1419 = vmatpush1.msra.mxu0 0.0
  %1420 = vmatprep.subr.mxu0 0.0
  %1421 = vmatpush1.msra.mxu0 0.0
  %1422 = vmatprep.subr.mxu0 0.0
  %1423 = vmatpush1.msra.mxu0 0.0
  %1424 = vmatprep.subr.mxu0 0.0
  %1425 = vmatpush1.msra.mxu0 0.0
  %1426 = vmatprep.subr.mxu0 0.0
  %1427 = vmatpush1.msra.mxu0 0.0
  %1428 = vmatprep.subr.mxu0 0.0
  %1429 = vmatpush1.msra.mxu0 0.0
  %1430 = vmatprep.subr.mxu0 0.0
  %1431 = vmatpush1.msra.mxu0 0.0
  %1432 = vmatprep.subr.mxu0 0.0
  %1433 = vmatpush1.msra.mxu0 0.0
  %1434 = vmatprep.subr.mxu0 0.0
  %1435 = vmatpush1.msra.mxu0 0.0
  %1436 = vmatprep.subr.mxu0 0.0
  %1437 = vmatpush1.msra.mxu0 0.0
  %1438 = vmatprep.subr.mxu0 0.0
  %1439 = vmatpush1.msra.mxu0 0.0
  %1440 = vmatprep.subr.mxu0 0.0
  %1441 = vmatpush1.msra.mxu0 0.0
  %1442 = vmatprep.subr.mxu0 0.0
  %1443 = vmatpush1.msra.mxu0 0.0
  %1444 = vmatprep.subr.mxu0 0.0
  %1445 = vmatpush1.msra.mxu0 0.0
  %1446 = vmatprep.subr.mxu0 0.0
  %1447 = vmatpush1.msra.mxu0 0.0
  %1448 = vmatprep.subr.mxu0 0.0
  %1449 = vmatpush1.msra.mxu0 0.0
  %1450 = vmatprep.subr.mxu0 0.0
  %1451 = vmatpush1.msra.mxu0 0.0
  %1452 = vmatprep.mubr.f32.mxu0 0.0
  %1453 = vmatmul.mubr.f32.gmra.mrb[0].mxu0 %v1341
  %v1454 = vpop.f32.mrb[0].mxu0
  %v1455 = vadd.f32 %v1337, %v1454
  %v1456 = vpop.f32.mrb[0].mxu0
  %1457 = vmatprep.mubr.f32.mxu0 0.0
  %1458 = vmatmul.mubr.f32.gmra.mrb[0].mxu0 %v1344
  %v1459 = vpop.f32.mrb[0].mxu0
  %v1460 = vadd.f32 %v1337, %v1459
  %v1461 = vpop.f32.mrb[0].mxu0
  %1462 = vmatprep.mubr.f32.mxu0 0.0
  %1463 = vmatmul.mubr.f32.gmra.mrb[0].mxu0 %v1347
  %v1464 = vpop.f32.mrb[0].mxu0
  %v1465 = vadd.f32 %v1337, %v1464
  %v1466 = vpop.f32.mrb[0].mxu0
  %1467 = vmatprep.mubr.f32.mxu0 0.0
  %1468 = vmatmul.mubr.f32.gmra.mrb[0].mxu0 %v1350
  %v1469 = vpop.f32.mrb[0].mxu0
  %v1470 = vadd.f32 %v1337, %v1469
  %v1471 = vpop.f32.mrb[0].mxu0
  %1472 = vmatprep.mubr.f32.mxu0 0.0
  %1473 = vmatmul.mubr.f32.gmra.mrb[0].mxu0 %v1353
  %v1474 = vpop.f32.mrb[0].mxu0
  %v1475 = vadd.f32 %v1337, %v1474
  %v1476 = vpop.f32.mrb[0].mxu0
  %1477 = vmatprep.mubr.f32.mxu0 0.0
  %1478 = vmatmul.mubr.f32.gmra.mrb[0].mxu0 %v1356
  %v1479 = vpop.f32.mrb[0].mxu0
  %v1480 = vadd.f32 %v1337, %v1479
  %v1481 = vpop.f32.mrb[0].mxu0
  %1482 = vmatprep.mubr.f32.mxu0 0.0
  %1483 = vmatmul.mubr.f32.gmra.mrb[0].mxu0 %v1359
  %v1484 = vpop.f32.mrb[0].mxu0
  %v1485 = vadd.f32 %v1337, %v1484
  %v1486 = vpop.f32.mrb[0].mxu0
  %1487 = vmatprep.mubr.f32.mxu0 0.0
  %1488 = vmatmul.mubr.f32.gmra.mrb[0].mxu0 %v1362
  %v1489 = vpop.f32.mrb[0].mxu0
  %v1490 = vadd.f32 %v1337, %v1489
  %v1491 = vpop.f32.mrb[0].mxu0
  %1492 = vmatprep.mubr.f32.mxu0 0.0
  %1493 = vmatmul.mubr.f32.gmra.mrb[0].mxu0 %v1365
  %v1494 = vpop.f32.mrb[0].mxu0
  %v1495 = vadd.f32 %v1337, %v1494
  %v1496 = vpop.f32.mrb[0].mxu0
  %1497 = vmatprep.mubr.f32.mxu0 0.0
  %1498 = vmatmul.mubr.f32.gmra.mrb[0].mxu0 %v1368
  %v1499 = vpop.f32.mrb[0].mxu0
  %v1500 = vadd.f32 %v1337, %v1499
  %v1501 = vpop.f32.mrb[0].mxu0
  %1502 = vmatprep.mubr.f32.mxu0 0.0
  %1503 = vmatmul.mubr.f32.gmra.mrb[0].mxu0 %v1371
  %v1504 = vpop.f32.mrb[0].mxu0
  %v1505 = vadd.f32 %v1337, %v1504
  %v1506 = vpop.f32.mrb[0].mxu0
  %1507 = vmatprep.mubr.f32.mxu0 0.0
  %1508 = vmatmul.mubr.f32.gmra.mrb[0].mxu0 %v1374
  %v1509 = vpop.f32.mrb[0].mxu0
  %v1510 = vadd.f32 %v1337, %v1509
  %v1511 = vpop.f32.mrb[0].mxu0
  %1512 = vmatprep.mubr.f32.mxu0 0.0
  %1513 = vmatmul.mubr.f32.gmra.mrb[0].mxu0 %v1377
  %v1514 = vpop.f32.mrb[0].mxu0
  %v1515 = vadd.f32 %v1337, %v1514
  %v1516 = vpop.f32.mrb[0].mxu0
  %1517 = vmatprep.mubr.f32.mxu0 0.0
  %1518 = vmatmul.mubr.f32.gmra.mrb[0].mxu0 %v1380
  %v1519 = vpop.f32.mrb[0].mxu0
  %v1520 = vadd.f32 %v1337, %v1519
  %v1521 = vpop.f32.mrb[0].mxu0
  %1522 = vmatprep.mubr.f32.mxu0 0.0
  %1523 = vmatmul.mubr.f32.gmra.mrb[0].mxu0 %v1383
  %v1524 = vpop.f32.mrb[0].mxu0
  %v1525 = vadd.f32 %v1337, %v1524
  %v1526 = vpop.f32.mrb[0].mxu0
  %1527 = vmatprep.mubr.f32.mxu0 0.0
  %1528 = vmatmul.mubr.f32.gmra.mrb[0].mxu0 %v1386
  %v1529 = vpop.f32.mrb[0].mxu0
  %v1530 = vadd.f32 %v1337, %v1529
  %v1531 = vpop.f32.mrb[0].mxu0
  %1532 = vdwg.mxu0
  %v1533 = vmul.f32 %v1455, %v1455
  %v1534 = vmul.f32 %v1460, %v1460
  %v1535 = vmul.f32 %v1465, %v1465
  %v1536 = vmul.f32 %v1470, %v1470
  %v1537 = vmul.f32 %v1475, %v1475
  %v1538 = vmul.f32 %v1480, %v1480
  %v1539 = vmul.f32 %v1485, %v1485
  %v1540 = vmul.f32 %v1490, %v1490
  %v1541 = vmul.f32 %v1495, %v1495
  %v1542 = vmul.f32 %v1500, %v1500
  %v1543 = vmul.f32 %v1505, %v1505
  %v1544 = vmul.f32 %v1510, %v1510
  %v1545 = vmul.f32 %v1515, %v1515
  %v1546 = vmul.f32 %v1520, %v1520
  %v1547 = vmul.f32 %v1525, %v1525
  %v1548 = vmul.f32 %v1530, %v1530
  %vm1549 = vcmask 130048
  %v1550 = vsel %vm1549, %v1533, 0.0
  %1551 = vadd.xlane.f32.xlu0 %v1550
  %v1552 = vpop.xlane.xlu0 %1551
  %v1553 = vsel %vm1549, %v1534, 0.0
  %1554 = vadd.xlane.f32.xlu0 %v1553
  %v1555 = vpop.xlane.xlu0 %1554
  %v1556 = vsel %vm1549, %v1535, 0.0
  %1557 = vadd.xlane.f32.xlu0 %v1556
  %v1558 = vpop.xlane.xlu0 %1557
  %v1559 = vsel %vm1549, %v1536, 0.0
  %1560 = vadd.xlane.f32.xlu0 %v1559
  %v1561 = vpop.xlane.xlu0 %1560
  %v1562 = vsel %vm1549, %v1537, 0.0
  %1563 = vadd.xlane.f32.xlu0 %v1562
  %v1564 = vpop.xlane.xlu0 %1563
  %v1565 = vsel %vm1549, %v1538, 0.0
  %1566 = vadd.xlane.f32.xlu0 %v1565
  %v1567 = vpop.xlane.xlu0 %1566
  %v1568 = vsel %vm1549, %v1539, 0.0
  %1569 = vadd.xlane.f32.xlu0 %v1568
  %v1570 = vpop.xlane.xlu0 %1569
  %v1571 = vsel %vm1549, %v1540, 0.0
  %1572 = vadd.xlane.f32.xlu0 %v1571
  %v1573 = vpop.xlane.xlu0 %1572
  %v1574 = vsel %vm1549, %v1541, 0.0
  %1575 = vadd.xlane.f32.xlu0 %v1574
  %v1576 = vpop.xlane.xlu0 %1575
  %v1577 = vsel %vm1549, %v1542, 0.0
  %1578 = vadd.xlane.f32.xlu0 %v1577
  %v1579 = vpop.xlane.xlu0 %1578
  %v1580 = vsel %vm1549, %v1543, 0.0
  %1581 = vadd.xlane.f32.xlu0 %v1580
  %v1582 = vpop.xlane.xlu0 %1581
  %v1583 = vsel %vm1549, %v1544, 0.0
  %1584 = vadd.xlane.f32.xlu0 %v1583
  %v1585 = vpop.xlane.xlu0 %1584
  %v1586 = vsel %vm1549, %v1545, 0.0
  %1587 = vadd.xlane.f32.xlu0 %v1586
  %v1588 = vpop.xlane.xlu0 %1587
  %v1589 = vsel %vm1549, %v1546, 0.0
  %1590 = vadd.xlane.f32.xlu0 %v1589
  %v1591 = vpop.xlane.xlu0 %1590
  %v1592 = vsel %vm1549, %v1547, 0.0
  %1593 = vadd.xlane.f32.xlu0 %v1592
  %v1594 = vpop.xlane.xlu0 %1593
  %v1595 = vsel %vm1549, %v1548, 0.0
  %1596 = vadd.xlane.f32.xlu0 %v1595
  %v1597 = vpop.xlane.xlu0 %1596
  %v1598 = vmax.f32 %v1552, 1e-24
  %v1599 = vmax.f32 %v1555, 1e-24
  %v1600 = vmax.f32 %v1558, 1e-24
  %v1601 = vmax.f32 %v1561, 1e-24
  %v1602 = vmax.f32 %v1564, 1e-24
  %v1603 = vmax.f32 %v1567, 1e-24
  %v1604 = vmax.f32 %v1570, 1e-24
  %v1605 = vmax.f32 %v1573, 1e-24
  %v1606 = vmax.f32 %v1576, 1e-24
  %v1607 = vmax.f32 %v1579, 1e-24
  %v1608 = vmax.f32 %v1582, 1e-24
  %v1609 = vmax.f32 %v1585, 1e-24
  %v1610 = vmax.f32 %v1588, 1e-24
  %v1611 = vmax.f32 %v1591, 1e-24
  %v1612 = vmax.f32 %v1594, 1e-24
  %v1613 = vmax.f32 %v1597, 1e-24
  %v1614 = vrsqrt.pop %v1598
  %v1615 = vrsqrt.pop %v1599
  %v1616 = vrsqrt.pop %v1600
  %v1617 = vrsqrt.pop %v1601
  %v1618 = vrsqrt.pop %v1602
  %v1619 = vrsqrt.pop %v1603
  %v1620 = vrsqrt.pop %v1604
  %v1621 = vrsqrt.pop %v1605
  %v1622 = vrsqrt.pop %v1606
  %v1623 = vrsqrt.pop %v1607
  %v1624 = vrsqrt.pop %v1608
  %v1625 = vrsqrt.pop %v1609
  %v1626 = vrsqrt.pop %v1610
  %v1627 = vrsqrt.pop %v1611
  %v1628 = vrsqrt.pop %v1612
  %v1629 = vrsqrt.pop %v1613
  %v1630 = vmul.f32 %v1455, %v1614
  %v1631 = vmul.f32 %v1460, %v1615
  %v1632 = vmul.f32 %v1465, %v1616
  %v1633 = vmul.f32 %v1470, %v1617
  %v1634 = vmul.f32 %v1475, %v1618
  %v1635 = vmul.f32 %v1480, %v1619
  %v1636 = vmul.f32 %v1485, %v1620
  %v1637 = vmul.f32 %v1490, %v1621
  %v1638 = vmul.f32 %v1495, %v1622
  %v1639 = vmul.f32 %v1500, %v1623
  %v1640 = vmul.f32 %v1505, %v1624
  %v1641 = vmul.f32 %v1510, %v1625
  %v1642 = vmul.f32 %v1515, %v1626
  %v1643 = vmul.f32 %v1520, %v1627
  %v1644 = vmul.f32 %v1525, %v1628
  %v1645 = vmul.f32 %v1530, %v1629
  %1646 = vst.msk [vmem:[%s5] sm:$0xff] %vm1549, %v1630
  %1647 = vst.msk [vmem:[%s5 + $0x8] sm:$0xff] %vm1549, %v1631
  %1648 = vst.msk [vmem:[%s5 + $0x10] sm:$0xff] %vm1549, %v1632
  %1649 = vst.msk [vmem:[%s5 + $0x18] sm:$0xff] %vm1549, %v1633
  %1650 = vst.msk [vmem:[%s5 + $0x20] sm:$0xff] %vm1549, %v1634
  %1651 = vst.msk [vmem:[%s5 + $0x28] sm:$0xff] %vm1549, %v1635
  %1652 = vst.msk [vmem:[%s5 + $0x30] sm:$0xff] %vm1549, %v1636
  %1653 = vst.msk [vmem:[%s5 + $0x38] sm:$0xff] %vm1549, %v1637
  %1654 = vst.msk [vmem:[%s5 + $0x40] sm:$0xff] %vm1549, %v1638
  %1655 = vst.msk [vmem:[%s5 + $0x48] sm:$0xff] %vm1549, %v1639
  %1656 = vst.msk [vmem:[%s5 + $0x50] sm:$0xff] %vm1549, %v1640
  %1657 = vst.msk [vmem:[%s5 + $0x58] sm:$0xff] %vm1549, %v1641
  %1658 = vst.msk [vmem:[%s5 + $0x60] sm:$0xff] %vm1549, %v1642
  %1659 = vst.msk [vmem:[%s5 + $0x68] sm:$0xff] %vm1549, %v1643
  %1660 = vst.msk [vmem:[%s5 + $0x70] sm:$0xff] %vm1549, %v1644
  %1661 = vst.msk [vmem:[%s5 + $0x78] sm:$0xff] %vm1549, %v1645
  // Predicated region
  $region22: #{tpu_custom_call.1} parent=0 // pred_check
    _
  $region23: #{tpu_custom_call.1} parent=0 // pred_check_branch
    %1663 = sbr.rel (0) target = $region25
  $region24: #{tpu_custom_call.1} parent=0 // pred_region
    _
  $region25: #{tpu_custom_call.1} parent=0 // pred_fallthru
    _
  // Predicated region
  $region26: #{tpu_custom_call.1} parent=0 // pred_check
    _
  $region27: #{tpu_custom_call.1} parent=0 // pred_check_branch
    %1665 = sbr.rel (0) target = $region29
  $region28: #{tpu_custom_call.1} parent=0 // pred_region
    _
  $region29: #{tpu_custom_call.1} parent=0 // pred_fallthru
    _

</llo_original>
